<compile_context>
chip_gen: v7x
topology: tpu7x:2x2x1
jax: 0.10.0
libtpu: 0.0.40
codegen_flags: <defaults>
</compile_context>

<pallas_src>
import functools

import jax
import jax.numpy as jnp
from jax.experimental import pallas as pl
from jax.experimental.pallas import tpu as pltpu

# TODO(synk): the pretrained BiomedCLIP text encoder + tokenizer
# (open_clip create_model_from_pretrained / get_tokenizer) are not
# reproducible in-script; raw_embeddings are synthesized deterministically.

LN_EPS = 1e-5
_MIB = 1024 * 1024

# Single-buffer the resident weights when the JAX build supports pipeline_mode.
_HAS_BUFFERED = hasattr(pl, "Buffered")


def _vmem_capacity_bytes():
    """Physical VMEM of this chip; conservative 64 MiB (v7x) if unknown."""
    try:
        cap = int(getattr(pltpu.get_tpu_info(), "vmem_capacity_bytes", 0))
        if cap > 0:
            return cap
    except Exception:  # hardware query only; kernel errors are never swallowed
        pass
    return 64 * _MIB


_VMEM_CAP = _vmem_capacity_bytes()


def _round_up(x, m):
    return (x + m - 1) // m * m


def _lane_round(n):
    # v6e/v7x MXU tiles are 256x256 (v5e is 4x 128x128). Real CLIP feature
    # dims (512 / 768) are already 256-multiples; only use 256 alignment for
    # large dims so tiny demo shapes don't over-pad.
    return _round_up(n, 256) if n >= 256 else _round_up(n, 128)


def _vmem_need_bytes(tm, Dp, Hp, x_itemsize, out_itemsize):
    """Rough per-kernel VMEM footprint, incl. f32 LN/SiLU intermediates."""
    wbuf = 1 if _HAS_BUFFERED else 2
    return (2 * tm * Dp * x_itemsize            # x tile, double-buffered
            + 2 * tm * Hp * out_itemsize        # out tile, double-buffered
            + wbuf * (Dp * Hp * 2               # W1 bf16 (resident)
                      + Hp * Hp * 2             # W2 bf16 (resident)
                      + 8 * Hp * 4)             # fused bias/LN/mask slab f32
            + 5 * tm * Hp * 4)                  # h / cent / normed / h2 temps


def _pick_tm(M, Dp, Hp, x_itemsize, out_itemsize):
    """Largest row tile that fits the VMEM budget, keeping >= 2 grid steps
    (v7x has 2 TensorCores; the 'parallel' axis only shards with > 1 step)."""
    two_step_cap = max(8, _round_up(-(-M // 2), 8))
    budget = int(0.6 * _VMEM_CAP)
    for cand in (1024, 512, 256, 128, 64, 32, 16, 8):
        if cand <= two_step_cap and _vmem_need_bytes(
                cand, Dp, Hp, x_itemsize, out_itemsize) <= budget:
            return cand
    # TODO(synk): for very large diffusion_dim (Hp >= ~2048) W2 should get an
    # output-column grid axis instead of being fully resident.
    return 8


def _projection_kernel(x_ref, w1_ref, vecs_ref, w2_ref, o_ref, *,
                       inv_h, needs_mask):
    """Fused Linear -> SiLU -> LayerNorm -> Linear on one row tile.

    x_ref:    (tm, Dp)  f32 or bf16 (cast to bf16 here, right before the MXU)
    w1_ref:   (Dp, Hp)  bf16
    vecs_ref: (8,  Hp)  f32  rows = [b1, gamma, beta, b2, col_mask, 0, 0, 0]
    w2_ref:   (Hp, Hp)  bf16
    o_ref:    (tm, Hp)  final dtype (lane-dense: Hp is a 128-multiple)
    """
    vecs = vecs_ref[...]
    b1 = vecs[0:1, :]
    gamma = vecs[1:2, :]
    beta = vecs[2:3, :]
    b2 = vecs[3:4, :]

    # Linear 1 on the MXU: bf16 x bf16 -> f32 accumulation.
    x = x_ref[...].astype(jnp.bfloat16)
    h = jnp.dot(x, w1_ref[...], preferred_element_type=jnp.float32) + b1

    # SiLU in f32 (sigmoid uses the EUP slot).
    h = h * jax.nn.sigmoid(h)

    # LayerNorm over the REAL feature width. Padded columns of h are exactly 0
    # (padded W1 columns / b1 entries are 0 and SiLU(0)=0), so the sum over Hp
    # equals the sum over H; only the centered values need masking.
    mean = jnp.sum(h, axis=-1, keepdims=True) * inv_h
    cent = h - mean
    if needs_mask:
        cent = cent * vecs[4:5, :]          # zero out padded columns
    var = jnp.sum(cent * cent, axis=-1, keepdims=True) * inv_h
    normed = cent * jax.lax.rsqrt(var + LN_EPS)
    h2 = normed * gamma + beta              # padded cols -> 0 (gamma/beta pad 0)

    # Linear 2 on the MXU: downcast only at the MXU input.
    y = jnp.dot(h2.astype(jnp.bfloat16), w2_ref[...],
                preferred_element_type=jnp.float32) + b2

    o_ref[...] = y.astype(o_ref.dtype)


@functools.partial(jax.jit, static_argnames=("tm_override",))
def _clip_projection_impl(raw_embeddings, params, *, tm_override=None):
    w1, b1 = params["w1"], params["b1"]
    gamma, beta = params["gamma"], params["beta"]
    w2, b2 = params["w2"], params["b2"]

    B, L, D = raw_embeddings.shape
    H = w1.shape[1]
    M = B * L
    out_dtype = raw_embeddings.dtype
    out_itemsize = jnp.dtype(out_dtype).itemsize

    Dp = _lane_round(D)
    Hp = _lane_round(H)

    if tm_override is not None:
        tm = int(tm_override)
    else:
        tm = _pick_tm(M, Dp, Hp, jnp.dtype(raw_embeddings.dtype).itemsize,
                      out_itemsize)
    Mp = _round_up(M, tm)
    grid = (Mp // tm,)

    # x: avoid any pre-pass when already aligned (real CLIP dims); otherwise
    # pad + cast to bf16 in a single fused XLA op.
    x2d = raw_embeddings.reshape(M, D)
    if (Mp, Dp) != (M, D):
        x2d = jnp.pad(x2d.astype(jnp.bfloat16), ((0, Mp - M), (0, Dp - D)))

    # Resident weights in bf16; biases / LN params / column mask fused into a
    # single (8, Hp) f32 slab.
    w1p = jnp.pad(w1.astype(jnp.bfloat16), ((0, Dp - D), (0, Hp - H)))
    w2p = jnp.pad(w2.astype(jnp.bfloat16), ((0, Hp - H), (0, Hp - H)))

    def _row(v):
        return jnp.pad(v.astype(jnp.float32), (0, Hp - H))

    mask_row = (jnp.arange(Hp) < H).astype(jnp.float32)
    zero_row = jnp.zeros((Hp,), jnp.float32)
    vecs = jnp.stack([_row(b1), _row(gamma), _row(beta), _row(b2),
                      mask_row, zero_row, zero_row, zero_row], axis=0)

    needs_mask = Hp != H
    kernel = functools.partial(_projection_kernel,
                               inv_h=float(1.0 / H), needs_mask=needs_mask)

    # Generation-aware VMEM limit: never above 90% of physical capacity.
    x_itemsize = jnp.dtype(x2d.dtype).itemsize
    need = _vmem_need_bytes(tm, Dp, Hp, x_itemsize, out_itemsize)
    vmem_limit = int(min(int(0.9 * _VMEM_CAP), max(32 * _MIB, 2 * need)))

    weight_kwargs = (
        {"pipeline_mode": pl.Buffered(1)} if _HAS_BUFFERED else {})

    out = pl.pallas_call(
        kernel,
        out_shape=jax.ShapeDtypeStruct((Mp, Hp), out_dtype),
        grid_spec=pltpu.PrefetchScalarGridSpec(
            num_scalar_prefetch=0,
            grid=grid,
            in_specs=[
                pl.BlockSpec((tm, Dp), lambda i: (i, 0)),                    # x
                pl.BlockSpec((Dp, Hp), lambda i: (0, 0), **weight_kwargs),   # W1
                pl.BlockSpec((8, Hp), lambda i: (0, 0), **weight_kwargs),    # slab
                pl.BlockSpec((Hp, Hp), lambda i: (0, 0), **weight_kwargs),   # W2
            ],
            out_specs=pl.BlockSpec((tm, Hp), lambda i: (i, 0)),
        ),
        compiler_params=pltpu.CompilerParams(
            dimension_semantics=("parallel",),
            vmem_limit_bytes=vmem_limit,
        ),
    )(x2d, w1p, vecs, w2p)

    # Skip the post-pass entirely when no padding was applied.
    if (Mp, Hp) != (M, H):
        out = out[:M, :H]
    projected = out.reshape(B, L, H)
    return raw_embeddings, projected


def clip_projection(raw_embeddings, params, *, tm_override=None):
    """Apply the CLIPEncoder projection head with a fused Pallas kernel."""
    return _clip_projection_impl(raw_embeddings, params,
                                 tm_override=tm_override)


def _reference_projection(raw_embeddings, params, *, mxu_dtype=jnp.float32):
    """Pure-JAX reference of the projection head (PyTorch semantics).

    mxu_dtype=bf16 mirrors the kernel's MXU-input casts for a tight check.
    """
    w1, b1 = params["w1"], params["b1"]
    gamma, beta = params["gamma"], params["beta"]
    w2, b2 = params["w2"], params["b2"]
    B, L, D = raw_embeddings.shape
    x = raw_embeddings.reshape(B * L, D).astype(jnp.float32)
    h = jnp.dot(x.astype(mxu_dtype), w1.astype(mxu_dtype),
                preferred_element_type=jnp.float32) + b1
    h = h * jax.nn.sigmoid(h)
    mean = jnp.mean(h, axis=-1, keepdims=True)
    var = jnp.mean(jnp.square(h - mean), axis=-1, keepdims=True)
    hn = (h - mean) * jax.lax.rsqrt(var + LN_EPS) * gamma + beta
    y = jnp.dot(hn.astype(mxu_dtype), w2.astype(mxu_dtype),
                preferred_element_type=jnp.float32) + b2
    return y.reshape(B, L, -1)


def make_params(key, embedding_dim, diffusion_dim):
    k1, k2, k3, k4 = jax.random.split(key, 4)
    scale1 = 1.0 / jnp.sqrt(embedding_dim)
    scale2 = 1.0 / jnp.sqrt(diffusion_dim)
    return {
        # nn.Linear stores weight as (out, in); we keep (in, out) for x @ W.
        "w1": jax.random.uniform(k1, (embedding_dim, diffusion_dim),
                                 jnp.float32, -scale1, scale1),
        "b1": jax.random.uniform(k2, (diffusion_dim,),
                                 jnp.float32, -scale1, scale1),
        "gamma": jnp.ones((diffusion_dim,), jnp.float32),   # LayerNorm weight
        "beta": jnp.zeros((diffusion_dim,), jnp.float32),   # LayerNorm bias
        "w2": jax.random.uniform(k3, (diffusion_dim, diffusion_dim),
                                 jnp.float32, -scale2, scale2),
        "b2": jax.random.uniform(k4, (diffusion_dim,),
                                 jnp.float32, -scale2, scale2),
    }


if __name__ == "__main__":
    # batch, seq (max_length), embedding_dim, diffusion_dim
    B, L, D, H = 2, 8, 32, 64

    key = jax.random.PRNGKey(0)
    k_emb, k_par = jax.random.split(key)

    # Stand-in for model.encode_text(tokenizer(text)) raw embeddings.
    raw_embeddings = jax.random.normal(k_emb, (B, L, D), jnp.float32)
    params = make_params(k_par, D, H)

    raw_out, projected = clip_projection(raw_embeddings, params)
    jax.block_until_ready(projected)

    assert raw_out.shape == (B, L, D)
    assert projected.shape == (B, L, H)

    # Tight check vs. a reference that mirrors the kernel's bf16 MXU inputs.
    ref_bf16 = _reference_projection(raw_embeddings, params,
                                     mxu_dtype=jnp.bfloat16)
    assert jnp.allclose(projected, ref_bf16, atol=1e-3, rtol=1e-3)

    # Loose check vs. the pure-f32 PyTorch-semantics reference
    # (difference is only bf16 rounding of the MXU operands).
    ref_f32 = _reference_projection(raw_embeddings, params)
    assert jnp.allclose(projected, ref_f32, atol=5e-2, rtol=5e-2)

    print("KERNEL_OK")
</pallas_src>

<mosaic_0001>
module attributes {stable_mosaic.version = 11 : i64} {
  func.func @_projection_kernel(%arg0: i32, %arg1: memref<8x128xbf16, #tpu.memory_space<vmem>>, %arg2: memref<128x128xbf16, #tpu.memory_space<vmem>>, %arg3: memref<8x128xf32, #tpu.memory_space<vmem>>, %arg4: memref<128x128xbf16, #tpu.memory_space<vmem>>, %arg5: memref<8x128xf32, #tpu.memory_space<vmem>>) attributes {dimension_semantics = [#tpu.dimension_semantics<parallel>], iteration_bounds = array<i64: 2>, scalar_prefetch = 0 : i64, scratch_operands = 0 : i64, tpu.core_type = #tpu.core_type<tc>, window_params = [{transform_indices = @transform_0, window_bounds = array<i64: 8, 128>}, {pipeline_mode = #tpu.pipeline_mode<synchronous>, transform_indices = @transform_1, window_bounds = array<i64: 128, 128>}, {pipeline_mode = #tpu.pipeline_mode<synchronous>, transform_indices = @transform_2, window_bounds = array<i64: 8, 128>}, {pipeline_mode = #tpu.pipeline_mode<synchronous>, transform_indices = @transform_3, window_bounds = array<i64: 128, 128>}, {transform_indices = @transform_4, window_bounds = array<i64: 8, 128>}]} {
    %c0 = arith.constant 0 : index
    %c0_0 = arith.constant 0 : index
    %0 = vector.load %arg3[%c0, %c0_0] : memref<8x128xf32, #tpu.memory_space<vmem>>, vector<8x128xf32>
    %1 = vector.extract_strided_slice %0 {offsets = [0, 0], sizes = [1, 128], strides = [1, 1]} : vector<8x128xf32> to vector<1x128xf32>
    %2 = vector.extract_strided_slice %0 {offsets = [1, 0], sizes = [1, 128], strides = [1, 1]} : vector<8x128xf32> to vector<1x128xf32>
    %3 = vector.extract_strided_slice %0 {offsets = [2, 0], sizes = [1, 128], strides = [1, 1]} : vector<8x128xf32> to vector<1x128xf32>
    %4 = vector.extract_strided_slice %0 {offsets = [3, 0], sizes = [1, 128], strides = [1, 1]} : vector<8x128xf32> to vector<1x128xf32>
    %c0_1 = arith.constant 0 : index
    %c0_2 = arith.constant 0 : index
    %5 = vector.load %arg1[%c0_1, %c0_2] : memref<8x128xbf16, #tpu.memory_space<vmem>>, vector<8x128xbf16>
    %c0_3 = arith.constant 0 : index
    %c0_4 = arith.constant 0 : index
    %6 = vector.load %arg2[%c0_3, %c0_4] : memref<128x128xbf16, #tpu.memory_space<vmem>>, vector<128x128xbf16>
    %cst = arith.constant dense<0.000000e+00> : vector<8x128xf32>
    %7 = tpu.matmul %5, %6, %cst {dimension_numbers = #tpu.dot_dimension_numbers<[1], [0], [0], [1], [0, 0, 1, 1], [], []>} : vector<8x128xbf16>, vector<128x128xbf16>, vector<8x128xf32> -> vector<8x128xf32>
    %8 = vector.broadcast %1 : vector<1x128xf32> to vector<8x128xf32>
    %9 = arith.addf %7, %8 : vector<8x128xf32>
    %10 = arith.negf %9 : vector<8x128xf32>
    %11 = math.exp %10 : vector<8x128xf32>
    %cst_5 = arith.constant 1.000000e+00 : f32
    %12 = vector.broadcast %cst_5 : f32 to vector<8x128xf32>
    %13 = arith.addf %12, %11 : vector<8x128xf32>
    %14 = arith.divf %12, %13 : vector<8x128xf32>
    %15 = arith.mulf %9, %14 : vector<8x128xf32>
    %cst_6 = arith.constant dense<0.000000e+00> : vector<8xf32>
    %16 = vector.multi_reduction <add>, %15, %cst_6 [1] : vector<8x128xf32> to vector<8xf32>
    %17 = vector.shape_cast %16 : vector<8xf32> to vector<8x1xf32>
    %cst_7 = arith.constant 1.562500e-02 : f32
    %18 = vector.broadcast %cst_7 : f32 to vector<8x1xf32>
    %19 = arith.mulf %17, %18 : vector<8x1xf32>
    %20 = vector.broadcast %19 : vector<8x1xf32> to vector<8x128xf32>
    %21 = arith.subf %15, %20 : vector<8x128xf32>
    %22 = vector.extract_strided_slice %0 {offsets = [4, 0], sizes = [1, 128], strides = [1, 1]} : vector<8x128xf32> to vector<1x128xf32>
    %23 = vector.broadcast %22 : vector<1x128xf32> to vector<8x128xf32>
    %24 = arith.mulf %21, %23 : vector<8x128xf32>
    %25 = arith.mulf %24, %24 : vector<8x128xf32>
    %cst_8 = arith.constant dense<0.000000e+00> : vector<8xf32>
    %26 = vector.multi_reduction <add>, %25, %cst_8 [1] : vector<8x128xf32> to vector<8xf32>
    %27 = vector.shape_cast %26 : vector<8xf32> to vector<8x1xf32>
    %cst_9 = arith.constant 1.562500e-02 : f32
    %28 = vector.broadcast %cst_9 : f32 to vector<8x1xf32>
    %29 = arith.mulf %27, %28 : vector<8x1xf32>
    %cst_10 = arith.constant 9.99999974E-6 : f32
    %30 = vector.broadcast %cst_10 : f32 to vector<8x1xf32>
    %31 = arith.addf %29, %30 : vector<8x1xf32>
    %32 = math.rsqrt %31 : vector<8x1xf32>
    %33 = vector.broadcast %32 : vector<8x1xf32> to vector<8x128xf32>
    %34 = arith.mulf %24, %33 : vector<8x128xf32>
    %35 = vector.broadcast %2 : vector<1x128xf32> to vector<8x128xf32>
    %36 = arith.mulf %34, %35 : vector<8x128xf32>
    %37 = vector.broadcast %3 : vector<1x128xf32> to vector<8x128xf32>
    %38 = arith.addf %36, %37 : vector<8x128xf32>
    %39 = arith.truncf %38 : vector<8x128xf32> to vector<8x128xbf16>
    %c0_11 = arith.constant 0 : index
    %c0_12 = arith.constant 0 : index
    %40 = vector.load %arg4[%c0_11, %c0_12] : memref<128x128xbf16, #tpu.memory_space<vmem>>, vector<128x128xbf16>
    %cst_13 = arith.constant dense<0.000000e+00> : vector<8x128xf32>
    %41 = tpu.matmul %39, %40, %cst_13 {dimension_numbers = #tpu.dot_dimension_numbers<[1], [0], [0], [1], [0, 0, 1, 1], [], []>} : vector<8x128xbf16>, vector<128x128xbf16>, vector<8x128xf32> -> vector<8x128xf32>
    %42 = vector.broadcast %4 : vector<1x128xf32> to vector<8x128xf32>
    %43 = arith.addf %41, %42 : vector<8x128xf32>
    %c0_14 = arith.constant 0 : index
    %c0_15 = arith.constant 0 : index
    %44 = vector.load %arg5[%c0_14, %c0_15] : memref<8x128xf32, #tpu.memory_space<vmem>>, vector<8x128xf32>
    tpu.vector_store %arg5[%c0_14, %c0_15], %43 {strides = array<i32>} : memref<8x128xf32, #tpu.memory_space<vmem>>, vector<8x128xf32>,
    return
  }
  func.func @transform_0(%arg0: i32) -> (i32, i32) {
    %c0_i32 = arith.constant 0 : i32
    %c0_i32_0 = arith.constant 0 : i32
    return %arg0, %c0_i32 : i32, i32
  }
  func.func @transform_1(%arg0: i32) -> (i32, i32) {
    %c0_i32 = arith.constant 0 : i32
    %c0_i32_0 = arith.constant 0 : i32
    %c0_i32_1 = arith.constant 0 : i32
    return %c0_i32, %c0_i32_0 : i32, i32
  }
  func.func @transform_2(%arg0: i32) -> (i32, i32) {
    %c0_i32 = arith.constant 0 : i32
    %c0_i32_0 = arith.constant 0 : i32
    %c0_i32_1 = arith.constant 0 : i32
    return %c0_i32, %c0_i32_0 : i32, i32
  }
  func.func @transform_3(%arg0: i32) -> (i32, i32) {
    %c0_i32 = arith.constant 0 : i32
    %c0_i32_0 = arith.constant 0 : i32
    %c0_i32_1 = arith.constant 0 : i32
    return %c0_i32, %c0_i32_0 : i32, i32
  }
  func.func @transform_4(%arg0: i32) -> (i32, i32) {
    %c0_i32 = arith.constant 0 : i32
    %c0_i32_0 = arith.constant 0 : i32
    return %arg0, %c0_i32 : i32, i32
  }
}

</mosaic_0001>

<llo_original>
// kernel: _clip_projection_impl.1
$region0: #{_clip_projection_impl.1}
  #allocation0 [shape = 'u32[]', space=smem, size = 0x4, offset = 0x4, fixed_abs, tag = 'smem constant byte address 0x4 - core index']
  #allocation1 [shape = 'u32[144,128]{1,0:T(1,128)}', space=vmem, size = 0x12000, scoped, tag = 'internal scratch']
  %s0 = inlined_call_operand.vmem [shape: bf16[16,128], index: 0, kind: input, shape index: {}]
  %s1 = inlined_call_operand.vmem [shape: bf16[128,128], index: 1, kind: input, shape index: {}]
  %s2 = inlined_call_operand.vmem [shape: f32[8,128], index: 2, kind: input, shape index: {}]
  %s3 = inlined_call_operand.vmem [shape: bf16[128,128], index: 3, kind: input, shape index: {}]
  %s4 = inlined_call_operand.vmem [shape: f32[16,128], index: 4, kind: output, shape index: {}]
  %s5 = sld [smem:[#allocation0]]
  $region49: #{_clip_projection_impl.1} parent=0
    _
  %s7 = ssub.s32 1, %s5
  %s8 = scalar_select 0, %s7, %s5
  loop: start=0, step=1, limit=4
  $region2: #{_clip_projection_impl.1} parent=0 // loop_pre_header
    _
  $region3: #{_clip_projection_impl.1} parent=0 // loop_header
    %s10 = sphi 0, %s14
    %p11 = scmp.ge.s32.totalorder %s10, 4
    %s20 = sphi 0, %s22
    %s23 = sphi 0, %s20
    %s24 = sphi 0, %s23
    %s40 = sphi 0, %s24
    %s44 = sphi 0, %s44
    %s46 = sphi 0, %s44
    %s47 = sphi 0, %s46
    %s61 = sphi 0, %s47
    %s65 = sphi 0, %s65
    %s67 = sphi 0, %s65
    %s68 = sphi 0, %s67
    %s82 = sphi 0, %s68
    %s86 = sphi 0, %s86
    %s88 = sphi 0, %s86
    %s89 = sphi 0, %s88
    %s103 = sphi 0, %s89
    %s109 = sphi 0, %s111
    %s112 = sphi 0, %s109
    %s113 = sphi 0, %s112
    %s129 = sphi 0, %s113
  $region4: #{_clip_projection_impl.1} parent=0 // loop_header_branch
    %13 = sbr.rel (%p11) target = $region8
  $region5: #{_clip_projection_impl.1} parent=0 // loop_body
    %s15 = ssub.s32 %s10, 1
    %s16 = ssub.s32 %s10, 2
    %s17 = sadd.s32 %s10, 1
    %s18 = ssub.s32 %s10, %s17
    %p19 = scmp.eq.s32.totalorder %s18, 0
    %s21 = sadd.s32 %s20, 1
    %s22 = scalar_select %p19, %s20, %s21
    %p25 = pneg %p19
    %p26 = scmp.eq.s32.totalorder %s10, 1
    %p27 = por %p25, %p26
    %p28 = scmp.ne.s32.totalorder %s20, %s23
    %p29 = scmp.eq.s32.totalorder %s10, 0
    %p30 = por %p28, %p29
    %p31 = scmp.ne.s32.totalorder %s20, %s23
    %p32 = scmp.eq.s32.totalorder %s15, 1
    %p33 = por %p31, %p32
    %p34 = scmp.ne.s32.totalorder %s23, %s24
    %p35 = scmp.eq.s32.totalorder %s15, 0
    %p36 = por %p34, %p35
    %p37 = scmp.ne.s32.totalorder %s23, %s24
    %p38 = scmp.eq.s32.totalorder %s16, 1
    %p39 = por %p37, %p38
    %p41 = scmp.ne.s32.totalorder %s24, %s40
    %p42 = scmp.eq.s32.totalorder %s16, 0
    %p43 = por %p41, %p42
    %s45 = sadd.s32 %s44, 1
    %p48 = scmp.eq.s32.totalorder %s10, 1
    %p49 = scmp.ne.s32.totalorder %s44, %s46
    %p50 = scmp.eq.s32.totalorder %s10, 0
    %p51 = por %p49, %p50
    %p52 = scmp.ne.s32.totalorder %s44, %s46
    %p53 = scmp.eq.s32.totalorder %s15, 1
    %p54 = por %p52, %p53
    %p55 = scmp.ne.s32.totalorder %s46, %s47
    %p56 = scmp.eq.s32.totalorder %s15, 0
    %p57 = por %p55, %p56
    %p58 = scmp.ne.s32.totalorder %s46, %s47
    %p59 = scmp.eq.s32.totalorder %s16, 1
    %p60 = por %p58, %p59
    %p62 = scmp.ne.s32.totalorder %s47, %s61
    %p63 = scmp.eq.s32.totalorder %s16, 0
    %p64 = por %p62, %p63
    %s66 = sadd.s32 %s65, 1
    %p69 = scmp.eq.s32.totalorder %s10, 1
    %p70 = scmp.ne.s32.totalorder %s65, %s67
    %p71 = scmp.eq.s32.totalorder %s10, 0
    %p72 = por %p70, %p71
    %p73 = scmp.ne.s32.totalorder %s65, %s67
    %p74 = scmp.eq.s32.totalorder %s15, 1
    %p75 = por %p73, %p74
    %p76 = scmp.ne.s32.totalorder %s67, %s68
    %p77 = scmp.eq.s32.totalorder %s15, 0
    %p78 = por %p76, %p77
    %p79 = scmp.ne.s32.totalorder %s67, %s68
    %p80 = scmp.eq.s32.totalorder %s16, 1
    %p81 = por %p79, %p80
    %p83 = scmp.ne.s32.totalorder %s68, %s82
    %p84 = scmp.eq.s32.totalorder %s16, 0
    %p85 = por %p83, %p84
    %s87 = sadd.s32 %s86, 1
    %p90 = scmp.eq.s32.totalorder %s10, 1
    %p91 = scmp.ne.s32.totalorder %s86, %s88
    %p92 = scmp.eq.s32.totalorder %s10, 0
    %p93 = por %p91, %p92
    %p94 = scmp.ne.s32.totalorder %s86, %s88
    %p95 = scmp.eq.s32.totalorder %s15, 1
    %p96 = por %p94, %p95
    %p97 = scmp.ne.s32.totalorder %s88, %s89
    %p98 = scmp.eq.s32.totalorder %s15, 0
    %p99 = por %p97, %p98
    %p100 = scmp.ne.s32.totalorder %s88, %s89
    %p101 = scmp.eq.s32.totalorder %s16, 1
    %p102 = por %p100, %p101
    %p104 = scmp.ne.s32.totalorder %s89, %s103
    %p105 = scmp.eq.s32.totalorder %s16, 0
    %p106 = por %p104, %p105
    %s107 = ssub.s32 %s10, %s17
    %p108 = scmp.eq.s32.totalorder %s107, 0
    %s110 = sadd.s32 %s109, 1
    %s111 = scalar_select %p108, %s109, %s110
    %p114 = pneg %p108
    %p115 = scmp.eq.s32.totalorder %s10, 1
    %p116 = por %p114, %p115
    %p117 = scmp.ne.s32.totalorder %s109, %s112
    %p118 = scmp.eq.s32.totalorder %s10, 0
    %p119 = por %p117, %p118
    %p120 = scmp.ne.s32.totalorder %s109, %s112
    %p121 = scmp.eq.s32.totalorder %s15, 1
    %p122 = por %p120, %p121
    %p123 = scmp.ne.s32.totalorder %s112, %s113
    %p124 = scmp.eq.s32.totalorder %s15, 0
    %p125 = por %p123, %p124
    %p126 = scmp.ne.s32.totalorder %s112, %s113
    %p127 = scmp.eq.s32.totalorder %s16, 1
    %p128 = por %p126, %p127
    %p130 = scmp.ne.s32.totalorder %s113, %s129
    %p131 = scmp.eq.s32.totalorder %s16, 0
    %p132 = por %p130, %p131
    %p133 = scmp.le.s32.totalorder 1, %s10
    %p134 = scmp.lt.s32.totalorder %s10, 3
    %p135 = pnand %p133, %p134
    %p136 = pneg %p135
    // Predicated region
    $region9: #{_clip_projection_impl.1} parent=5 // pred_check
      _
    $region10: #{_clip_projection_impl.1} parent=5 // pred_check_branch
      %138 = sbr.rel (%p135) target = $region12
    $region11: #{_clip_projection_impl.1} parent=5 // pred_region
      %s139 = ssub.s32 %s10, 1
      // Predicated region
      $region13: #{_clip_projection_impl.1} parent=11 // pred_check
        %p140 = pneg %p57
      $region14: #{_clip_projection_impl.1} parent=11 // pred_check_branch
        %142 = sbr.rel (%p140) target = $region16
      $region15: #{_clip_projection_impl.1} parent=11 // pred_region
        _
      $region16: #{_clip_projection_impl.1} parent=11 // pred_fallthru
        _
      // Predicated region
      $region17: #{_clip_projection_impl.1} parent=11 // pred_check
        %p143 = pneg %p78
      $region18: #{_clip_projection_impl.1} parent=11 // pred_check_branch
        %145 = sbr.rel (%p143) target = $region20
      $region19: #{_clip_projection_impl.1} parent=11 // pred_region
        _
      $region20: #{_clip_projection_impl.1} parent=11 // pred_fallthru
        _
      // Predicated region
      $region21: #{_clip_projection_impl.1} parent=11 // pred_check
        %p146 = pneg %p99
      $region22: #{_clip_projection_impl.1} parent=11 // pred_check_branch
        %148 = sbr.rel (%p146) target = $region24
      $region23: #{_clip_projection_impl.1} parent=11 // pred_region
        _
      $region24: #{_clip_projection_impl.1} parent=11 // pred_fallthru
        _
    $region12: #{_clip_projection_impl.1} parent=5 // pred_fallthru
      _
    %p149 = scmp.lt.s32.totalorder %s10, 2
    // Predicated region
    $region25: #{_clip_projection_impl.1} parent=5 // pred_check
      %p150 = pneg %p149
    $region26: #{_clip_projection_impl.1} parent=5 // pred_check_branch
      %152 = sbr.rel (%p150) target = $region28
    $region27: #{_clip_projection_impl.1} parent=5 // pred_region
      // Predicated region
      $region29: #{_clip_projection_impl.1} parent=27 // pred_check
        %p153 = pneg %p30
      $region30: #{_clip_projection_impl.1} parent=27 // pred_check_branch
        %155 = sbr.rel (%p153) target = $region32
      $region31: #{_clip_projection_impl.1} parent=27 // pred_region
        %p156 = scmp.lt.s32.totalorder %s10, 1
        %s157 = scalar_select %p156, %s10, 1
        %s158 = smul.addr %s157, 4
        %s159 = scalar_lea.vmem %s0, %s158
      $region32: #{_clip_projection_impl.1} parent=27 // pred_fallthru
        _
    $region28: #{_clip_projection_impl.1} parent=5 // pred_fallthru
      _
    %p160 = scmp.le.s32.totalorder 1, %s10
    %p161 = scmp.lt.s32.totalorder %s10, 3
    %p162 = pnand %p160, %p161
    %p163 = pneg %p162
    // Predicated region
    $region33: #{_clip_projection_impl.1} parent=5 // pred_check
      _
    $region34: #{_clip_projection_impl.1} parent=5 // pred_check_branch
      %165 = sbr.rel (%p162) target = $region36
    $region35: #{_clip_projection_impl.1} parent=5 // pred_region
      %s166 = ssub.s32 %s10, 1
      %p167 = scmp.lt.s32.totalorder %s15, 1
      %s168 = scalar_select %p167, %s15, 1
      %s169 = smul.addr %s168, 4
      %s170 = scalar_lea.vmem %s0, %s169
      %p171 = pneg %p36
      %p172 = pneg %p33
      %p173 = pneg %p57
      %p174 = pneg %p54
      %p175 = pneg %p78
      %p176 = pneg %p75
      %p177 = pneg %p99
      %p178 = pneg %p96
      %p179 = pneg %p125
      %p180 = pneg %p122
      %p181 = scmp.lt.s32.totalorder %s15, 1
      %s182 = scalar_select %p181, %s15, 1
      %s183 = smul.addr %s182, 8
      %s184 = scalar_lea.vmem %s4, %s183
      %p185 = scmp.lt.s32.totalorder %s15, 1
      %s186 = scalar_select %p185, %s15, 1
      %s187 = smul.addr %s186, 4
      %s188 = scalar_lea.vmem %s0, %s187
      %p189 = scmp.lt.s32.totalorder %s15, 1
      %s190 = scalar_select %p189, %s15, 1
      %s191 = smul.addr %s190, 8
      %s192 = scalar_lea.vmem %s4, %s191
      %v194 = vld [vmem:[%s2] sm:$0xff]
      %v195 = vld [vmem:[%s188] sm:$0xf]
      %v196 = vld [vmem:[%s1] sm:$0xf]
      %v197 = vld [vmem:[%s1 + $0x4] sm:$0xf]
      %v198 = vld [vmem:[%s1 + $0x8] sm:$0xf]
      %v199 = vld [vmem:[%s1 + $0xc] sm:$0xf]
      %v200 = vld [vmem:[%s1 + $0x10] sm:$0xf]
      %v201 = vld [vmem:[%s1 + $0x14] sm:$0xf]
      %v202 = vld [vmem:[%s1 + $0x18] sm:$0xf]
      %v203 = vld [vmem:[%s1 + $0x1c] sm:$0xf]
      %v204 = vld [vmem:[%s1 + $0x20] sm:$0xf]
      %v205 = vld [vmem:[%s1 + $0x24] sm:$0xf]
      %v206 = vld [vmem:[%s1 + $0x28] sm:$0xf]
      %v207 = vld [vmem:[%s1 + $0x2c] sm:$0xf]
      %v208 = vld [vmem:[%s1 + $0x30] sm:$0xf]
      %v209 = vld [vmem:[%s1 + $0x34] sm:$0xf]
      %v210 = vld [vmem:[%s1 + $0x38] sm:$0xf]
      %v211 = vld [vmem:[%s1 + $0x3c] sm:$0xf]
      %v212 = vlaneseq
      %v213 = vshrl.u32 %v212, 7
      %v214 = vsub.s32 0, %v213
      %v215 = vrot.slane %v194, %v214
      %v232 = vunpack.c.l.b16 %v196
      %v233 = vunpack.c.l.b16 %v197
      %v234 = vunpack.c.l.b16 %v198
      %v235 = vunpack.c.l.b16 %v199
      %v236 = vunpack.c.l.b16 %v200
      %v237 = vunpack.c.l.b16 %v201
      %v238 = vunpack.c.l.b16 %v202
      %v239 = vunpack.c.l.b16 %v203
      %v240 = vunpack.c.l.b16 %v204
      %v241 = vunpack.c.l.b16 %v205
      %v242 = vunpack.c.l.b16 %v206
      %v243 = vunpack.c.l.b16 %v207
      %v244 = vunpack.c.l.b16 %v208
      %v245 = vunpack.c.l.b16 %v209
      %v246 = vunpack.c.l.b16 %v210
      %v247 = vunpack.c.l.b16 %v211
      %v248 = vpack.c.b16 %v233, %v232
      %v249 = vpack.c.b16 %v235, %v234
      %v250 = vpack.c.b16 %v237, %v236
      %v251 = vpack.c.b16 %v239, %v238
      %v252 = vpack.c.b16 %v241, %v240
      %v253 = vpack.c.b16 %v243, %v242
      %v254 = vpack.c.b16 %v245, %v244
      %v255 = vpack.c.b16 %v247, %v246
      %264 = vmatprep.subr.bf16.mxu0 0
      %265 = vmatpush1.bf16.msra.mxu0 %v248
      %266 = vmatprep.subr.bf16.mxu0 0
      %267 = vmatpush1.bf16.msra.mxu0 %v249
      %268 = vmatprep.subr.bf16.mxu0 0
      %269 = vmatpush1.bf16.msra.mxu0 %v250
      %270 = vmatprep.subr.bf16.mxu0 0
      %271 = vmatpush1.bf16.msra.mxu0 %v251
      %272 = vmatprep.subr.bf16.mxu0 0
      %273 = vmatpush1.bf16.msra.mxu0 %v252
      %274 = vmatprep.subr.bf16.mxu0 0
      %275 = vmatpush1.bf16.msra.mxu0 %v253
      %276 = vmatprep.subr.bf16.mxu0 0
      %277 = vmatpush1.bf16.msra.mxu0 %v254
      %278 = vmatprep.subr.bf16.mxu0 0
      %279 = vmatpush1.bf16.msra.mxu0 %v255
      %280 = vmatprep.subr.bf16.mxu0 0
      %281 = vmatpush1.bf16.msra.mxu0 0
      %282 = vmatprep.subr.bf16.mxu0 0
      %283 = vmatpush1.bf16.msra.mxu0 0
      %284 = vmatprep.subr.bf16.mxu0 0
      %285 = vmatpush1.bf16.msra.mxu0 0
      %286 = vmatprep.subr.bf16.mxu0 0
      %287 = vmatpush1.bf16.msra.mxu0 0
      %288 = vmatprep.subr.bf16.mxu0 0
      %289 = vmatpush1.bf16.msra.mxu0 0
      %290 = vmatprep.subr.bf16.mxu0 0
      %291 = vmatpush1.bf16.msra.mxu0 0
      %292 = vmatprep.subr.bf16.mxu0 0
      %293 = vmatpush1.bf16.msra.mxu0 0
      %294 = vmatprep.subr.bf16.mxu0 0
      %295 = vmatpush1.bf16.msra.mxu0 0
      %296 = vmatprep.mubr.bf16.mxu0 0
      %297 = vmatmul.mubr.bf16.gmra.mrb[0].mxu0 %v195
      %v298 = vpop.f32.mrb[0].mxu0
      %v299 = vadd.f32 %v215, %v298
      %v300 = vpop.f32.mrb[0].mxu0
      %v301 = vpop.f32.mrb[0].mxu0
      %v302 = vpop.f32.mrb[0].mxu0
      %303 = vdwg.mxu0
      %v304 = vxor.u32 %v299, 2147483648
      %v305 = vmul.f32 %v304, 1.442695
      %v306 = vpow.pop %v305
      %v307 = vadd.f32 %v306, 1.0
      %v308 = vrcp.pop %v307
      %v309 = vmul.f32 1.0, %v308
      %v310 = vmul.f32 %v299, %v309
      %311 = vadd.xlane.f32.xlu0 %v310
      %v312 = vpop.xlane.xlu0 %311
      %v313 = vmul.f32 %v312, 0.015625
      %v314 = vsub.f32 %v310, %v313
      %v315 = vlaneseq
      %v316 = vshrl.u32 %v315, 7
      %v317 = vsub.s32 4, %v316
      %v318 = vrot.slane %v194, %v317
      %v319 = vmul.f32 %v314, %v318
      %v320 = vmul.f32 %v319, %v319
      %321 = vadd.xlane.f32.xlu0 %v320
      %v322 = vpop.xlane.xlu0 %321
      %v323 = vmul.f32 %v322, 0.015625
      %v324 = vadd.f32 %v323, 1e-05
      %v325 = vrsqrt.pop %v324
      %v326 = vmul.f32 %v319, %v325
      %v327 = vlaneseq
      %v328 = vshrl.u32 %v327, 7
      %v329 = vsub.s32 1, %v328
      %v330 = vrot.slane %v194, %v329
      %v331 = vmul.f32 %v326, %v330
      %v332 = vlaneseq
      %v333 = vshrl.u32 %v332, 7
      %v334 = vsub.s32 2, %v333
      %v335 = vrot.slane %v194, %v334
      %v336 = vadd.f32 %v331, %v335
      %v337 = vpack.c.bf16 %v336, %v336
      %v338 = vld [vmem:[%s3] sm:$0xf]
      %v339 = vld [vmem:[%s3 + $0x4] sm:$0xf]
      %v340 = vld [vmem:[%s3 + $0x8] sm:$0xf]
      %v341 = vld [vmem:[%s3 + $0xc] sm:$0xf]
      %v342 = vld [vmem:[%s3 + $0x10] sm:$0xf]
      %v343 = vld [vmem:[%s3 + $0x14] sm:$0xf]
      %v344 = vld [vmem:[%s3 + $0x18] sm:$0xf]
      %v345 = vld [vmem:[%s3 + $0x1c] sm:$0xf]
      %v346 = vld [vmem:[%s3 + $0x20] sm:$0xf]
      %v347 = vld [vmem:[%s3 + $0x24] sm:$0xf]
      %v348 = vld [vmem:[%s3 + $0x28] sm:$0xf]
      %v349 = vld [vmem:[%s3 + $0x2c] sm:$0xf]
      %v350 = vld [vmem:[%s3 + $0x30] sm:$0xf]
      %v351 = vld [vmem:[%s3 + $0x34] sm:$0xf]
      %v352 = vld [vmem:[%s3 + $0x38] sm:$0xf]
      %v353 = vld [vmem:[%s3 + $0x3c] sm:$0xf]
      %v354 = vlaneseq
      %v355 = vshrl.u32 %v354, 7
      %v356 = vsub.s32 3, %v355
      %v357 = vrot.slane %v194, %v356
      %v374 = vunpack.c.l.b16 %v338
      %v375 = vunpack.c.l.b16 %v339
      %v376 = vunpack.c.l.b16 %v340
      %v377 = vunpack.c.l.b16 %v341
      %v378 = vunpack.c.l.b16 %v342
      %v379 = vunpack.c.l.b16 %v343
      %v380 = vunpack.c.l.b16 %v344
      %v381 = vunpack.c.l.b16 %v345
      %v382 = vunpack.c.l.b16 %v346
      %v383 = vunpack.c.l.b16 %v347
      %v384 = vunpack.c.l.b16 %v348
      %v385 = vunpack.c.l.b16 %v349
      %v386 = vunpack.c.l.b16 %v350
      %v387 = vunpack.c.l.b16 %v351
      %v388 = vunpack.c.l.b16 %v352
      %v389 = vunpack.c.l.b16 %v353
      %v390 = vpack.c.b16 %v375, %v374
      %v391 = vpack.c.b16 %v377, %v376
      %v392 = vpack.c.b16 %v379, %v378
      %v393 = vpack.c.b16 %v381, %v380
      %v394 = vpack.c.b16 %v383, %v382
      %v395 = vpack.c.b16 %v385, %v384
      %v396 = vpack.c.b16 %v387, %v386
      %v397 = vpack.c.b16 %v389, %v388
      %406 = vmatprep.subr.bf16.mxu0 0
      %407 = vmatpush1.bf16.msra.mxu0 %v390
      %408 = vmatprep.subr.bf16.mxu0 0
      %409 = vmatpush1.bf16.msra.mxu0 %v391
      %410 = vmatprep.subr.bf16.mxu0 0
      %411 = vmatpush1.bf16.msra.mxu0 %v392
      %412 = vmatprep.subr.bf16.mxu0 0
      %413 = vmatpush1.bf16.msra.mxu0 %v393
      %414 = vmatprep.subr.bf16.mxu0 0
      %415 = vmatpush1.bf16.msra.mxu0 %v394
      %416 = vmatprep.subr.bf16.mxu0 0
      %417 = vmatpush1.bf16.msra.mxu0 %v395
      %418 = vmatprep.subr.bf16.mxu0 0
      %419 = vmatpush1.bf16.msra.mxu0 %v396
      %420 = vmatprep.subr.bf16.mxu0 0
      %421 = vmatpush1.bf16.msra.mxu0 %v397
      %422 = vmatprep.subr.bf16.mxu0 0
      %423 = vmatpush1.bf16.msra.mxu0 0
      %424 = vmatprep.subr.bf16.mxu0 0
      %425 = vmatpush1.bf16.msra.mxu0 0
      %426 = vmatprep.subr.bf16.mxu0 0
      %427 = vmatpush1.bf16.msra.mxu0 0
      %428 = vmatprep.subr.bf16.mxu0 0
      %429 = vmatpush1.bf16.msra.mxu0 0
      %430 = vmatprep.subr.bf16.mxu0 0
      %431 = vmatpush1.bf16.msra.mxu0 0
      %432 = vmatprep.subr.bf16.mxu0 0
      %433 = vmatpush1.bf16.msra.mxu0 0
      %434 = vmatprep.subr.bf16.mxu0 0
      %435 = vmatpush1.bf16.msra.mxu0 0
      %436 = vmatprep.subr.bf16.mxu0 0
      %437 = vmatpush1.bf16.msra.mxu0 0
      %438 = vmatprep.mubr.bf16.mxu0 0
      %439 = vmatmul.mubr.bf16.gmra.mrb[0].mxu0 %v337
      %v440 = vpop.f32.mrb[0].mxu0
      %v441 = vadd.f32 %v357, %v440
      %v442 = vpop.f32.mrb[0].mxu0
      %v443 = vpop.f32.mrb[0].mxu0
      %v444 = vpop.f32.mrb[0].mxu0
      %445 = vdwg.mxu0
      %446 = vst [vmem:[%s192] sm:$0xff] %v441
      %p447 = scmp.lt.s32.totalorder %s15, 1
      %s448 = scalar_select %p447, %s15, 1
      %s449 = smul.addr %s448, 8
      %s450 = scalar_lea.vmem %s4, %s449
      // Predicated region
      $region37: #{_clip_projection_impl.1} parent=35 // pred_check
        %p451 = pneg %p122
      $region38: #{_clip_projection_impl.1} parent=35 // pred_check_branch
        %453 = sbr.rel (%p451) target = $region40
      $region39: #{_clip_projection_impl.1} parent=35 // pred_region
        _
      $region40: #{_clip_projection_impl.1} parent=35 // pred_fallthru
        _
    $region36: #{_clip_projection_impl.1} parent=5 // pred_fallthru
      _
    %p454 = scmp.le.s32.totalorder 2, %s10
    // Predicated region
    $region41: #{_clip_projection_impl.1} parent=5 // pred_check
      %p455 = pneg %p454
    $region42: #{_clip_projection_impl.1} parent=5 // pred_check_branch
      %457 = sbr.rel (%p455) target = $region44
    $region43: #{_clip_projection_impl.1} parent=5 // pred_region
      %s458 = ssub.s32 %s10, 2
      // Predicated region
      $region45: #{_clip_projection_impl.1} parent=43 // pred_check
        %p459 = pneg %p128
      $region46: #{_clip_projection_impl.1} parent=43 // pred_check_branch
        %461 = sbr.rel (%p459) target = $region48
      $region47: #{_clip_projection_impl.1} parent=43 // pred_region
        %p462 = scmp.lt.s32.totalorder %s16, 1
        %s463 = scalar_select %p462, %s16, 1
        %s464 = smul.addr %s463, 8
        %s465 = scalar_lea.vmem %s4, %s464
      $region48: #{_clip_projection_impl.1} parent=43 // pred_fallthru
        _
    $region44: #{_clip_projection_impl.1} parent=5 // pred_fallthru
      _
  $region6: #{_clip_projection_impl.1} parent=0 // loop_footer
    %s14 = sadd.s32 1, %s10
  $region7: #{_clip_projection_impl.1} parent=0 // loop_footer_branch
    %9 = sbr.rel target = $region3
  $region8: #{_clip_projection_impl.1} parent=0 // loop_exit
    _

</llo_original>
